<compile_context>
chip_gen: v7x
topology: tpu7x:2x2x1
jax: 0.10.0
libtpu: 0.0.40
codegen_flags: <defaults>
</compile_context>

<pallas_src>
import functools

import jax
import jax.numpy as jnp
from jax.experimental import pallas as pl
from jax.experimental.pallas import tpu as pltpu


def _focal_loss_kernel(logits_ref, tgt_ref, out_ref, acc_ref, *,
                       gamma, ignore_index, clsoffset, C,
                       tile_rows, sub_rows, tiles_per_chunk, rows_total,
                       needs_row_mask):
    j = pl.program_id(2)  # reduction axis (row tiles within this image/chunk)

    @pl.when(j == 0)
    def _():
        acc_ref[...] = jnp.zeros_like(acc_ref)

    if needs_row_mask:
        blk = pl.program_id(1) * tiles_per_chunk + j  # global row-tile index (tail mask)

    # Compute in sub-blocks of the (tile_rows, 128) DMA tile: keeps live slabs at a few
    # vregs each (no spills) while the DMA tile stays large.  Fully static Python loop.
    for r0 in range(0, tile_rows, sub_rows):
        rs = min(sub_rows, tile_rows - r0)

        t = tgt_ref[0, r0:r0 + rs, :].astype(jnp.int32) - clsoffset     # (rs, 128)

        # class-axis max — short unrolled loop of per-vreg maximums (C is tiny)
        m = logits_ref[0, 0, r0:r0 + rs, :].astype(jnp.float32)
        for c in range(1, C):
            m = jnp.maximum(m, logits_ref[0, c, r0:r0 + rs, :].astype(jnp.float32))

        # softmax denominator + target-logit gather fused into one pass over classes
        s = jnp.zeros_like(m)
        xt = jnp.zeros_like(m)
        for c in range(C):
            xc = logits_ref[0, c, r0:r0 + rs, :].astype(jnp.float32)
            s = s + jnp.exp(xc - m)
            xt = xt + jnp.where(t == c, xc, 0.0)    # no bool->f32 cast, no extra multiply

        logpt = jnp.log(s) + m - xt                 # per-pixel CE (= -log softmax_target)

        # ignored pixels -> CE 0 (torch semantics); out-of-range tail rows (only when the
        # row count doesn't divide the tile, compile-time check) also masked out.
        valid = t != ignore_index
        if needs_row_mask:
            row = jax.lax.broadcasted_iota(jnp.int32, t.shape, 0)
            valid = jnp.logical_and(valid, (blk * tile_rows + r0 + row) < rows_total)
        logpt = jnp.where(valid, logpt, 0.0)

        # exact pt = exp(-logpt): keeps torch parity tight and makes masking trivial
        # (masked logpt == 0 -> pt == 1 -> focal == 0 -> contribution exactly 0).
        pt = jnp.exp(-logpt)
        u = 1.0 - pt
        if gamma == 2:                              # default path: no float pow on the EUP
            focal = u * u
        elif float(gamma).is_integer() and 0 <= int(gamma) <= 4:
            focal = jnp.ones_like(u)
            for _ in range(int(gamma)):
                focal = focal * u
        else:
            focal = u ** gamma

        acc_ref[r0:r0 + rs, :] += focal * logpt     # per-(row,lane) partial sums

    @pl.when(j == pl.num_programs(2) - 1)
    def _():
        total = jnp.sum(acc_ref[...])               # one small reduce per image/chunk
        out_ref[...] = jnp.full(out_ref.shape, total, dtype=out_ref.dtype)


def focal_loss(output, target, *, gamma=2.0, ignore_index=255, clsoffset=0,
               size_average=True, tile_p=16384, sub_rows=32):
    """output: (N, C, H, W) float (f32/bf16); target: (N, H, W) integer. Returns scalar."""
    N, C, H, W = output.shape
    HW = H * W
    P = N * HW                                   # .mean() denominator counts ALL pixels

    rows_total = pl.cdiv(HW, 128)
    HW_pad = rows_total * 128

    logits = output.reshape(N, C, HW)
    tgt = target.reshape(N, HW)                  # keep native (possibly narrow) dtype
    if HW_pad != HW:
        # One-off pad (HBM copy) only when HW isn't lane-aligned; padded pixels carry
        # ignore_index so they contribute exactly 0 — no per-step lane mask needed.
        logits = jnp.pad(logits, ((0, 0), (0, 0), (0, HW_pad - HW)))
        tgt = jnp.pad(tgt, ((0, 0), (0, HW_pad - HW)),
                      constant_values=ignore_index + clsoffset)
    logits = logits.reshape(N, C, rows_total, 128)   # zero-copy when HW % 128 == 0
    tgt = tgt.reshape(N, rows_total, 128)

    # --- tile sizing: large DMA tiles (amortize ~0.35us/grid-step), bounded by VMEM budget
    assert tile_p % 128 == 0, "tile_p must be a multiple of 128 (lane width)"
    desired_rows = max(8, tile_p // 128)
    itemsize = output.dtype.itemsize
    # per-row VMEM cost: 2x-buffered logits + target blocks, f32 acc scratch, headroom for
    # in-kernel f32 temporaries.
    per_row = 128 * (2 * C * itemsize + 2 * tgt.dtype.itemsize + 4 + 8 * 4)
    budget = 24 << 20                            # keep well inside v7x's 64 MiB physical
    max_rows = max(8, (budget // per_row) // 8 * 8)
    tile_rows = min(desired_rows, max_rows, rows_total)
    if rows_total >= 8:
        tile_rows = max(8, tile_rows // 8 * 8)   # (8,128) block-shape constraint
    else:
        tile_rows = rows_total                   # block == full dim (also allowed)
    num_tiles = pl.cdiv(rows_total, tile_rows)
    needs_row_mask = (rows_total % tile_rows) != 0
    sub = min(sub_rows, tile_rows)

    # --- megacore: with a single image, split the pixel axis into 2 "parallel" chunks so
    # both TensorCores on v7x get work; no-op on v5e/v6e and when N >= 2.
    if N == 1 and num_tiles >= 2 and num_tiles % 2 == 0:
        n_chunks = 2
    else:
        n_chunks = 1
    tiles_per_chunk = num_tiles // n_chunks

    kernel = functools.partial(
        _focal_loss_kernel,
        gamma=gamma, ignore_index=ignore_index, clsoffset=clsoffset, C=C,
        tile_rows=tile_rows, sub_rows=sub, tiles_per_chunk=tiles_per_chunk,
        rows_total=rows_total, needs_row_mask=needs_row_mask)

    # Scoped-VMEM request: actual blocks + scratch + temporaries + headroom, capped at
    # 32 MiB (<= half of physical VMEM; v7x has only 64 MiB total).
    block_bytes = (2 * C * tile_rows * 128 * itemsize        # logits blocks (x2 buffers)
                   + 2 * tile_rows * 128 * tgt.dtype.itemsize  # target blocks
                   + 2 * 8 * 128 * 4                         # output blocks
                   + tile_rows * 128 * 4                     # accumulator scratch
                   + 8 * sub * 128 * 4)                      # in-kernel f32 temporaries
    try:
        phys_vmem = pltpu.get_tpu_info().vmem_capacity_bytes
    except Exception:
        phys_vmem = 64 << 20
    vmem_bytes = int(min(max(2 * block_bytes, 8 << 20), 32 << 20, phys_vmem // 2))

    partials = pl.pallas_call(
        kernel,
        out_shape=jax.ShapeDtypeStruct((N, n_chunks, 8, 128), jnp.float32),
        grid_spec=pltpu.PrefetchScalarGridSpec(
            num_scalar_prefetch=0,
            grid=(N, n_chunks, tiles_per_chunk),
            in_specs=[
                pl.BlockSpec((1, C, tile_rows, 128),
                             lambda n, c, j: (n, 0, c * tiles_per_chunk + j, 0)),
                pl.BlockSpec((1, tile_rows, 128),
                             lambda n, c, j: (n, c * tiles_per_chunk + j, 0)),
            ],
            out_specs=pl.BlockSpec((1, 1, 8, 128), lambda n, c, j: (n, c, 0, 0)),
            scratch_shapes=[pltpu.VMEM((tile_rows, 128), jnp.float32)],
        ),
        compiler_params=pltpu.CompilerParams(
            dimension_semantics=("parallel", "parallel", "arbitrary"),
            vmem_limit_bytes=vmem_bytes),
    )(logits, tgt)

    total = jnp.sum(partials[:, :, 0, 0])        # tiny combine outside the kernel
    if size_average:
        total = total / jnp.float32(P)           # mean over ALL pixels (torch .mean())
    return total


def _ref_focal_loss(output, target, gamma=2.0, ignore_index=255, clsoffset=0):
    """Pure-JAX reference matching torch CrossEntropyLoss(reduce=False, ignore_index)."""
    x = output.astype(jnp.float32)
    t = target.astype(jnp.int32) - clsoffset
    lse = jax.nn.logsumexp(x, axis=1)                     # (N, H, W)
    valid = t != ignore_index
    t_safe = jnp.where(valid, t, 0)
    tgt_logit = jnp.take_along_axis(x, t_safe[:, None], axis=1)[:, 0]
    logpt = jnp.where(valid, lse - tgt_logit, 0.0)
    pt = jnp.exp(-logpt)
    loss = (1.0 - pt) ** gamma * logpt
    return loss.mean()


if __name__ == "__main__":
    key = jax.random.PRNGKey(0)
    k1, k2, k3 = jax.random.split(key, 3)

    N, C, H, W = 2, 4, 16, 16
    output = jax.random.normal(k1, (N, C, H, W), dtype=jnp.float32)
    target = jax.random.randint(k2, (N, H, W), 0, C, dtype=jnp.int32)
    # sprinkle some ignore_index pixels to exercise the masking path
    ignore_mask = jax.random.bernoulli(k3, 0.1, (N, H, W))
    target = jnp.where(ignore_mask, jnp.int32(255), target)

    loss = focal_loss(output, target)
    loss = jax.block_until_ready(loss)

    ref = _ref_focal_loss(output, target)
    assert jnp.allclose(loss, ref, rtol=1e-5, atol=1e-6), (loss, ref)

    print("KERNEL_OK")
</pallas_src>

<mosaic_0001>
module attributes {stable_mosaic.version = 11 : i64} {
  func.func @_focal_loss_kernel(%arg0: i32, %arg1: i32, %arg2: i32, %arg3: memref<1x4x2x128xf32, #tpu.memory_space<vmem>>, %arg4: memref<1x2x128xi32, #tpu.memory_space<vmem>>, %arg5: memref<1x1x8x128xf32, #tpu.memory_space<vmem>>, %arg6: memref<2x128xf32, #tpu.memory_space<vmem>>) attributes {dimension_semantics = [#tpu.dimension_semantics<parallel>, #tpu.dimension_semantics<parallel>, #tpu.dimension_semantics<arbitrary>], iteration_bounds = array<i64: 2, 1, 1>, scalar_prefetch = 0 : i64, scratch_operands = 1 : i64, tpu.core_type = #tpu.core_type<tc>, window_params = [{transform_indices = @transform_0, window_bounds = array<i64: 1, 4, 2, 128>}, {transform_indices = @transform_1, window_bounds = array<i64: 1, 2, 128>}, {transform_indices = @transform_2, window_bounds = array<i64: 1, 1, 8, 128>}]} {
    %c0_i32 = arith.constant 0 : i32
    %0 = arith.cmpi eq, %arg2, %c0_i32 : i32
    %1 = arith.extui %0 : i1 to i32
    %c0_i32_0 = arith.constant 0 : i32
    %2 = arith.cmpi ne, %1, %c0_i32_0 : i32
    scf.if %2 {
      %cst_48 = arith.constant 0.000000e+00 : f32
      %80 = vector.broadcast %cst_48 : f32 to vector<2x128xf32>
      %c0_49 = arith.constant 0 : index
      %c0_50 = arith.constant 0 : index
      %81 = vector.load %arg6[%c0_49, %c0_50] : memref<2x128xf32, #tpu.memory_space<vmem>>, vector<2x128xf32>
      tpu.vector_store %arg6[%c0_49, %c0_50], %80 {strides = array<i32>} : memref<2x128xf32, #tpu.memory_space<vmem>>, vector<2x128xf32>,
    } else {
    }
    %c0 = arith.constant 0 : index
    %c0_1 = arith.constant 0 : index
    %c0_2 = arith.constant 0 : index
    %3 = vector.load %arg4[%c0, %c0_1, %c0_2] : memref<1x2x128xi32, #tpu.memory_space<vmem>>, vector<1x2x128xi32>
    %4 = vector.shape_cast %3 : vector<1x2x128xi32> to vector<2x128xi32>
    %c0_i32_3 = arith.constant 0 : i32
    %5 = vector.broadcast %c0_i32_3 : i32 to vector<2x128xi32>
    %6 = arith.subi %4, %5 : vector<2x128xi32>
    %c0_4 = arith.constant 0 : index
    %c0_5 = arith.constant 0 : index
    %c0_6 = arith.constant 0 : index
    %c0_7 = arith.constant 0 : index
    %7 = vector.load %arg3[%c0_4, %c0_5, %c0_6, %c0_7] : memref<1x4x2x128xf32, #tpu.memory_space<vmem>>, vector<1x1x2x128xf32>
    %8 = vector.shape_cast %7 : vector<1x1x2x128xf32> to vector<2x128xf32>
    %c0_8 = arith.constant 0 : index
    %c1 = arith.constant 1 : index
    %c0_9 = arith.constant 0 : index
    %c0_10 = arith.constant 0 : index
    %9 = vector.load %arg3[%c0_8, %c1, %c0_9, %c0_10] : memref<1x4x2x128xf32, #tpu.memory_space<vmem>>, vector<1x1x2x128xf32>
    %10 = vector.shape_cast %9 : vector<1x1x2x128xf32> to vector<2x128xf32>
    %11 = arith.maximumf %8, %10 : vector<2x128xf32>
    %c0_11 = arith.constant 0 : index
    %c2 = arith.constant 2 : index
    %c0_12 = arith.constant 0 : index
    %c0_13 = arith.constant 0 : index
    %12 = vector.load %arg3[%c0_11, %c2, %c0_12, %c0_13] : memref<1x4x2x128xf32, #tpu.memory_space<vmem>>, vector<1x1x2x128xf32>
    %13 = vector.shape_cast %12 : vector<1x1x2x128xf32> to vector<2x128xf32>
    %14 = arith.maximumf %11, %13 : vector<2x128xf32>
    %c0_14 = arith.constant 0 : index
    %c3 = arith.constant 3 : index
    %c0_15 = arith.constant 0 : index
    %c0_16 = arith.constant 0 : index
    %15 = vector.load %arg3[%c0_14, %c3, %c0_15, %c0_16] : memref<1x4x2x128xf32, #tpu.memory_space<vmem>>, vector<1x1x2x128xf32>
    %16 = vector.shape_cast %15 : vector<1x1x2x128xf32> to vector<2x128xf32>
    %17 = arith.maximumf %14, %16 : vector<2x128xf32>
    %cst = arith.constant 0.000000e+00 : f32
    %18 = vector.broadcast %cst : f32 to vector<2x128xf32>
    %cst_17 = arith.constant 0.000000e+00 : f32
    %19 = vector.broadcast %cst_17 : f32 to vector<2x128xf32>
    %c0_18 = arith.constant 0 : index
    %c0_19 = arith.constant 0 : index
    %c0_20 = arith.constant 0 : index
    %c0_21 = arith.constant 0 : index
    %20 = vector.load %arg3[%c0_18, %c0_19, %c0_20, %c0_21] : memref<1x4x2x128xf32, #tpu.memory_space<vmem>>, vector<1x1x2x128xf32>
    %21 = vector.shape_cast %20 : vector<1x1x2x128xf32> to vector<2x128xf32>
    %22 = arith.subf %21, %17 : vector<2x128xf32>
    %23 = math.exp %22 : vector<2x128xf32>
    %24 = arith.addf %18, %23 : vector<2x128xf32>
    %c0_i32_22 = arith.constant 0 : i32
    %25 = vector.broadcast %c0_i32_22 : i32 to vector<2x128xi32>
    %26 = arith.cmpi eq, %6, %25 : vector<2x128xi32>
    %cst_23 = arith.constant 0.000000e+00 : f32
    %27 = vector.broadcast %cst_23 : f32 to vector<2x128xf32>
    %28 = arith.select %26, %21, %27 : vector<2x128xi1>, vector<2x128xf32>
    %29 = arith.addf %19, %28 : vector<2x128xf32>
    %c0_24 = arith.constant 0 : index
    %c1_25 = arith.constant 1 : index
    %c0_26 = arith.constant 0 : index
    %c0_27 = arith.constant 0 : index
    %30 = vector.load %arg3[%c0_24, %c1_25, %c0_26, %c0_27] : memref<1x4x2x128xf32, #tpu.memory_space<vmem>>, vector<1x1x2x128xf32>
    %31 = vector.shape_cast %30 : vector<1x1x2x128xf32> to vector<2x128xf32>
    %32 = arith.subf %31, %17 : vector<2x128xf32>
    %33 = math.exp %32 : vector<2x128xf32>
    %34 = arith.addf %24, %33 : vector<2x128xf32>
    %c1_i32 = arith.constant 1 : i32
    %35 = vector.broadcast %c1_i32 : i32 to vector<2x128xi32>
    %36 = arith.cmpi eq, %6, %35 : vector<2x128xi32>
    %cst_28 = arith.constant 0.000000e+00 : f32
    %37 = vector.broadcast %cst_28 : f32 to vector<2x128xf32>
    %38 = arith.select %36, %31, %37 : vector<2x128xi1>, vector<2x128xf32>
    %39 = arith.addf %29, %38 : vector<2x128xf32>
    %c0_29 = arith.constant 0 : index
    %c2_30 = arith.constant 2 : index
    %c0_31 = arith.constant 0 : index
    %c0_32 = arith.constant 0 : index
    %40 = vector.load %arg3[%c0_29, %c2_30, %c0_31, %c0_32] : memref<1x4x2x128xf32, #tpu.memory_space<vmem>>, vector<1x1x2x128xf32>
    %41 = vector.shape_cast %40 : vector<1x1x2x128xf32> to vector<2x128xf32>
    %42 = arith.subf %41, %17 : vector<2x128xf32>
    %43 = math.exp %42 : vector<2x128xf32>
    %44 = arith.addf %34, %43 : vector<2x128xf32>
    %c2_i32 = arith.constant 2 : i32
    %45 = vector.broadcast %c2_i32 : i32 to vector<2x128xi32>
    %46 = arith.cmpi eq, %6, %45 : vector<2x128xi32>
    %cst_33 = arith.constant 0.000000e+00 : f32
    %47 = vector.broadcast %cst_33 : f32 to vector<2x128xf32>
    %48 = arith.select %46, %41, %47 : vector<2x128xi1>, vector<2x128xf32>
    %49 = arith.addf %39, %48 : vector<2x128xf32>
    %c0_34 = arith.constant 0 : index
    %c3_35 = arith.constant 3 : index
    %c0_36 = arith.constant 0 : index
    %c0_37 = arith.constant 0 : index
    %50 = vector.load %arg3[%c0_34, %c3_35, %c0_36, %c0_37] : memref<1x4x2x128xf32, #tpu.memory_space<vmem>>, vector<1x1x2x128xf32>
    %51 = vector.shape_cast %50 : vector<1x1x2x128xf32> to vector<2x128xf32>
    %52 = arith.subf %51, %17 : vector<2x128xf32>
    %53 = math.exp %52 : vector<2x128xf32>
    %54 = arith.addf %44, %53 : vector<2x128xf32>
    %c3_i32 = arith.constant 3 : i32
    %55 = vector.broadcast %c3_i32 : i32 to vector<2x128xi32>
    %56 = arith.cmpi eq, %6, %55 : vector<2x128xi32>
    %cst_38 = arith.constant 0.000000e+00 : f32
    %57 = vector.broadcast %cst_38 : f32 to vector<2x128xf32>
    %58 = arith.select %56, %51, %57 : vector<2x128xi1>, vector<2x128xf32>
    %59 = arith.addf %49, %58 : vector<2x128xf32>
    %60 = math.log %54 : vector<2x128xf32>
    %61 = arith.addf %60, %17 : vector<2x128xf32>
    %62 = arith.subf %61, %59 : vector<2x128xf32>
    %c255_i32 = arith.constant 255 : i32
    %63 = vector.broadcast %c255_i32 : i32 to vector<2x128xi32>
    %64 = arith.cmpi ne, %6, %63 : vector<2x128xi32>
    %cst_39 = arith.constant 0.000000e+00 : f32
    %65 = vector.broadcast %cst_39 : f32 to vector<2x128xf32>
    %66 = arith.select %64, %62, %65 : vector<2x128xi1>, vector<2x128xf32>
    %cst_40 = arith.constant 0.000000e+00 : f32
    %67 = vector.broadcast %cst_40 : f32 to vector<2x128xf32>
    %68 = arith.subf %67, %66 : vector<2x128xf32>
    %69 = math.exp %68 : vector<2x128xf32>
    %cst_41 = arith.constant 1.000000e+00 : f32
    %70 = vector.broadcast %cst_41 : f32 to vector<2x128xf32>
    %71 = arith.subf %70, %69 : vector<2x128xf32>
    %72 = arith.mulf %71, %71 : vector<2x128xf32>
    %c0_42 = arith.constant 0 : index
    %c0_43 = arith.constant 0 : index
    %73 = vector.load %arg6[%c0_42, %c0_43] : memref<2x128xf32, #tpu.memory_space<vmem>>, vector<2x128xf32>
    %74 = arith.mulf %72, %66 : vector<2x128xf32>
    %75 = arith.addf %73, %74 : vector<2x128xf32>
    %c0_44 = arith.constant 0 : index
    %c0_45 = arith.constant 0 : index
    %76 = vector.load %arg6[%c0_44, %c0_45] : memref<2x128xf32, #tpu.memory_space<vmem>>, vector<2x128xf32>
    tpu.vector_store %arg6[%c0_44, %c0_45], %75 {strides = array<i32>} : memref<2x128xf32, #tpu.memory_space<vmem>>, vector<2x128xf32>,
    %c0_i32_46 = arith.constant 0 : i32
    %77 = arith.cmpi eq, %arg2, %c0_i32_46 : i32
    %78 = arith.extui %77 : i1 to i32
    %c0_i32_47 = arith.constant 0 : i32
    %79 = arith.cmpi ne, %78, %c0_i32_47 : i32
    scf.if %79 {
      %c0_48 = arith.constant 0 : index
      %c0_49 = arith.constant 0 : index
      %80 = vector.load %arg6[%c0_48, %c0_49] : memref<2x128xf32, #tpu.memory_space<vmem>>, vector<2x128xf32>
      %81 = vector.shape_cast %80 : vector<2x128xf32> to vector<1x2x128xf32>
      %cst_50 = arith.constant dense<0.000000e+00> : vector<1xf32>
      %82 = vector.multi_reduction <add>, %81, %cst_50 [1, 2] : vector<1x2x128xf32> to vector<1xf32>
      %83 = vector.shape_cast %82 : vector<1xf32> to vector<1x1x1xf32>
      %84 = vector.extract %83[0, 0, 0] : f32 from vector<1x1x1xf32>
      %85 = vector.broadcast %84 : f32 to vector<1x1x8x128xf32>
      %c0_51 = arith.constant 0 : index
      %c0_52 = arith.constant 0 : index
      %c0_53 = arith.constant 0 : index
      %c0_54 = arith.constant 0 : index
      %86 = vector.load %arg5[%c0_51, %c0_52, %c0_53, %c0_54] : memref<1x1x8x128xf32, #tpu.memory_space<vmem>>, vector<1x1x8x128xf32>
      tpu.vector_store %arg5[%c0_51, %c0_52, %c0_53, %c0_54], %85 {strides = array<i32>} : memref<1x1x8x128xf32, #tpu.memory_space<vmem>>, vector<1x1x8x128xf32>,
    } else {
    }
    return
  }
  func.func @transform_0(%arg0: i32, %arg1: i32, %arg2: i32) -> (i32, i32, i32, i32) {
    %c1_i32 = arith.constant 1 : i32
    %0 = arith.muli %arg1, %c1_i32 : i32
    %1 = arith.addi %0, %arg2 : i32
    %c0_i32 = arith.constant 0 : i32
    %c0_i32_0 = arith.constant 0 : i32
    %c0_i32_1 = arith.constant 0 : i32
    return %arg0, %c0_i32, %1, %c0_i32_0 : i32, i32, i32, i32
  }
  func.func @transform_1(%arg0: i32, %arg1: i32, %arg2: i32) -> (i32, i32, i32) {
    %c1_i32 = arith.constant 1 : i32
    %0 = arith.muli %arg1, %c1_i32 : i32
    %1 = arith.addi %0, %arg2 : i32
    %c0_i32 = arith.constant 0 : i32
    %c0_i32_0 = arith.constant 0 : i32
    return %arg0, %1, %c0_i32 : i32, i32, i32
  }
  func.func @transform_2(%arg0: i32, %arg1: i32, %arg2: i32) -> (i32, i32, i32, i32) {
    %c0_i32 = arith.constant 0 : i32
    %c0_i32_0 = arith.constant 0 : i32
    %c0_i32_1 = arith.constant 0 : i32
    return %arg0, %arg1, %c0_i32, %c0_i32_0 : i32, i32, i32, i32
  }
}

</mosaic_0001>

<llo_original>
// kernel: tpu_custom_call.1
$region0: #{tpu_custom_call.1}
  #allocation0 [shape = 'u32[]', space=smem, size = 0x4, offset = 0x4, fixed_abs, tag = 'smem constant byte address 0x4 - core index']
  #allocation1 [shape = 'u32[144,128]{1,0:T(1,128)}', space=vmem, size = 0x12000, scoped, tag = 'internal scratch']
  #allocation2 [shape = 'f32[2,128]{1,0:T(2,128)}', space=vmem, size = 0x400, scoped, tag = 'scratch operand']
  %s0 = inlined_call_operand.hbm [shape: f32[2,4,2,128], index: 0, kind: input, shape index: {}]
  %s1 = inlined_call_operand.hbm [shape: s32[2,2,128], index: 1, kind: input, shape index: {}]
  %s2 = inlined_call_operand.hbm [shape: f32[2,1,8,128], index: 2, kind: output, shape index: {}]
  %s3 = sld [smem:[#allocation0]]
  $region57: #{tpu_custom_call.1} parent=0
    _
  %s5 = ssub.s32 1, %s3
  %s6 = scalar_select 0, %s5, %s3
  $region1: #{tpu_custom_call.1} parent=0
    #allocation3 [shape = 'u8[8192]{0}', space=vmem, size = 0x2000, scoped, tag = 'input window, operand 0']
    #allocation4 [shape = 's32[2]{0}', space=sflag, size = 0x8, scoped, tag = 'scoped memory for tpu_custom_call.1']
    #allocation5 [shape = 's32[2]{0}', space=sflag, size = 0x8, scoped, tag = 'scoped memory for tpu_custom_call.1']
    #allocation6 [shape = 'u8[2048]{0}', space=vmem, size = 0x800, scoped, tag = 'input window, operand 1']
    #allocation7 [shape = 's32[2]{0}', space=sflag, size = 0x8, scoped, tag = 'scoped memory for tpu_custom_call.1']
    #allocation8 [shape = 'u8[8192]{0}', space=vmem, size = 0x2000, scoped, tag = 'output window, operand 0']
    %7 = vsyncpa [#allocation4], 0
    %s8 = scalar_lea.sflag [#allocation4], 1
    %9 = vsyncpa %s8, 0
    %10 = vsyncpa [#allocation7], 0
    %s11 = scalar_lea.sflag [#allocation7], 1
    %12 = vsyncpa %s11, 0
    %13 = vsyncpa [#allocation5], 0
    %s14 = scalar_lea.sflag [#allocation5], 1
    %15 = vsyncpa %s14, 0
    loop: start=0, step=1, limit=4
    $region2: #{tpu_custom_call.1} parent=1 // loop_pre_header
      _
    $region3: #{tpu_custom_call.1} parent=1 // loop_header
      %s17 = sphi 0, %s21
      %p18 = scmp.ge.s32.totalorder %s17, 4
      %s24 = sphi 0, %s43
      %s25 = sphi 0, %s39
      %s26 = sphi 0, %s35
      %s27 = sphi 0, %s24
      %s28 = sphi 0, %s25
      %s29 = sphi 0, %s26
      %s30 = sphi 0, %s27
      %s31 = sphi 0, %s28
      %s32 = sphi 0, %s29
      %s50 = sphi 0, %s52
      %s53 = sphi 0, %s50
      %s54 = sphi 0, %s53
      %s70 = sphi 0, %s54
      %s80 = sphi 0, %s82
      %s83 = sphi 0, %s80
      %s84 = sphi 0, %s83
      %s100 = sphi 0, %s84
      %s108 = sphi 0, %s110
      %s111 = sphi 0, %s108
      %s112 = sphi 0, %s111
      %s128 = sphi 0, %s112
    $region4: #{tpu_custom_call.1} parent=1 // loop_header_branch
      %20 = sbr.rel (%p18) target = $region8
    $region5: #{tpu_custom_call.1} parent=1 // loop_body
      %s22 = ssub.s32 %s17, 1
      %s23 = ssub.s32 %s17, 2
      %s33 = sadd.s32 1, %s26
      %p34 = scmp.ge.s32.totalorder %s33, 1
      %s35 = scalar_select %p34, 0, %s33
      %s36 = sadd.s32 1, %s25
      %s37 = scalar_select %p34, %s36, %s25
      %p38 = scmp.ge.s32.totalorder %s37, 1
      %s39 = scalar_select %p38, 0, %s37
      %s40 = sadd.s32 1, %s24
      %s41 = scalar_select %p38, %s40, %s24
      %p42 = scmp.ge.s32.totalorder %s41, 2
      %s43 = scalar_select %p42, 0, %s41
      %s44 = sadd.s32 %s25, %s26
      %s45 = sadd.s32 %s39, %s35
      %s46 = ssub.s32 %s24, %s43
      %s47 = ssub.s32 %s44, %s45
      %s48 = sor.u32 %s46, %s47
      %p49 = scmp.eq.s32.totalorder %s48, 0
      %s51 = sadd.s32 %s50, 1
      %s52 = scalar_select %p49, %s50, %s51
      %p55 = pneg %p49
      %p56 = scmp.eq.s32.totalorder %s17, 1
      %p57 = por %p55, %p56
      %p58 = scmp.ne.s32.totalorder %s50, %s53
      %p59 = scmp.eq.s32.totalorder %s17, 0
      %p60 = por %p58, %p59
      %p61 = scmp.ne.s32.totalorder %s50, %s53
      %p62 = scmp.eq.s32.totalorder %s22, 1
      %p63 = por %p61, %p62
      %p64 = scmp.ne.s32.totalorder %s53, %s54
      %p65 = scmp.eq.s32.totalorder %s22, 0
      %p66 = por %p64, %p65
      %p67 = scmp.ne.s32.totalorder %s53, %s54
      %p68 = scmp.eq.s32.totalorder %s23, 1
      %p69 = por %p67, %p68
      %p71 = scmp.ne.s32.totalorder %s54, %s70
      %p72 = scmp.eq.s32.totalorder %s23, 0
      %p73 = por %p71, %p72
      %s74 = sadd.s32 %s25, %s26
      %s75 = sadd.s32 %s39, %s35
      %s76 = ssub.s32 %s24, %s43
      %s77 = ssub.s32 %s74, %s75
      %s78 = sor.u32 %s76, %s77
      %p79 = scmp.eq.s32.totalorder %s78, 0
      %s81 = sadd.s32 %s80, 1
      %s82 = scalar_select %p79, %s80, %s81
      %p85 = pneg %p79
      %p86 = scmp.eq.s32.totalorder %s17, 1
      %p87 = por %p85, %p86
      %p88 = scmp.ne.s32.totalorder %s80, %s83
      %p89 = scmp.eq.s32.totalorder %s17, 0
      %p90 = por %p88, %p89
      %p91 = scmp.ne.s32.totalorder %s80, %s83
      %p92 = scmp.eq.s32.totalorder %s22, 1
      %p93 = por %p91, %p92
      %p94 = scmp.ne.s32.totalorder %s83, %s84
      %p95 = scmp.eq.s32.totalorder %s22, 0
      %p96 = por %p94, %p95
      %p97 = scmp.ne.s32.totalorder %s83, %s84
      %p98 = scmp.eq.s32.totalorder %s23, 1
      %p99 = por %p97, %p98
      %p101 = scmp.ne.s32.totalorder %s84, %s100
      %p102 = scmp.eq.s32.totalorder %s23, 0
      %p103 = por %p101, %p102
      %s104 = ssub.s32 %s24, %s43
      %s105 = ssub.s32 %s25, %s39
      %s106 = sor.u32 %s104, %s105
      %p107 = scmp.eq.s32.totalorder %s106, 0
      %s109 = sadd.s32 %s108, 1
      %s110 = scalar_select %p107, %s108, %s109
      %p113 = pneg %p107
      %p114 = scmp.eq.s32.totalorder %s17, 1
      %p115 = por %p113, %p114
      %p116 = scmp.ne.s32.totalorder %s108, %s111
      %p117 = scmp.eq.s32.totalorder %s17, 0
      %p118 = por %p116, %p117
      %p119 = scmp.ne.s32.totalorder %s108, %s111
      %p120 = scmp.eq.s32.totalorder %s22, 1
      %p121 = por %p119, %p120
      %p122 = scmp.ne.s32.totalorder %s111, %s112
      %p123 = scmp.eq.s32.totalorder %s22, 0
      %p124 = por %p122, %p123
      %p125 = scmp.ne.s32.totalorder %s111, %s112
      %p126 = scmp.eq.s32.totalorder %s23, 1
      %p127 = por %p125, %p126
      %p129 = scmp.ne.s32.totalorder %s112, %s128
      %p130 = scmp.eq.s32.totalorder %s23, 0
      %p131 = por %p129, %p130
      %p132 = scmp.le.s32.totalorder 1, %s17
      %p133 = scmp.lt.s32.totalorder %s17, 3
      %p134 = pnand %p132, %p133
      %p135 = pneg %p134
      // Predicated region
      $region9: #{tpu_custom_call.1} parent=5 // pred_check
        _
      $region10: #{tpu_custom_call.1} parent=5 // pred_check_branch
        %137 = sbr.rel (%p134) target = $region12
      $region11: #{tpu_custom_call.1} parent=5 // pred_region
        %s138 = ssub.s32 %s17, 1
      $region12: #{tpu_custom_call.1} parent=5 // pred_fallthru
        _
      %p139 = scmp.lt.s32.totalorder %s17, 2
      // Predicated region
      $region13: #{tpu_custom_call.1} parent=5 // pred_check
        %p140 = pneg %p139
      $region14: #{tpu_custom_call.1} parent=5 // pred_check_branch
        %142 = sbr.rel (%p140) target = $region16
      $region15: #{tpu_custom_call.1} parent=5 // pred_region
        // Predicated region
        $region17: #{tpu_custom_call.1} parent=15 // pred_check
          %p143 = pneg %p60
        $region18: #{tpu_custom_call.1} parent=15 // pred_check_branch
          %145 = sbr.rel (%p143) target = $region20
        $region19: #{tpu_custom_call.1} parent=15 // pred_region
          %s146 = sand.u32 %s50, 1
          %s147 = scalar_lea.sflag [#allocation4], %s146
          %s148 = sand.u32 %s50, 1
          %s149 = smul.addr %s148, 8
          %s150 = scalar_lea.vmem [#allocation3], %s149
          %s151 = sadd.s32 %s25, %s26
          %s153 = ssub.s32 128, 128
          %154 = vsyncadd %s147, %s153
          %s155 = smul.addr %s24, 4
          %s156 = sadd.s32 %s151, %s155
          %s157 = smul.addr %s156, 32
          %s158 = scalar_lea.hbm %s0, %s157
          %s159 = sshll.u32 %s150, 4
          %s160 = int_to_ptr.vmem [resolvable:$true] %s159
          %165 = dma.hbm_to_vmem [thread:$0]  %s158, 128, %s160, %s147, 32, 32, 2
        $region20: #{tpu_custom_call.1} parent=15 // pred_fallthru
          _
        // Predicated region
        $region21: #{tpu_custom_call.1} parent=15 // pred_check
          %p166 = pneg %p90
        $region22: #{tpu_custom_call.1} parent=15 // pred_check_branch
          %168 = sbr.rel (%p166) target = $region24
        $region23: #{tpu_custom_call.1} parent=15 // pred_region
          %s169 = sand.u32 %s80, 1
          %s170 = scalar_lea.sflag [#allocation7], %s169
          %s171 = sand.u32 %s80, 1
          %s172 = smul.addr %s171, 2
          %s173 = scalar_lea.vmem [#allocation6], %s172
          %s174 = sadd.s32 %s25, %s26
          %s176 = ssub.s32 32, 32
          %177 = vsyncadd %s170, %s176
          %s178 = sadd.s32 %s174, %s24
          %s179 = smul.addr %s178, 32
          %s180 = scalar_lea.hbm %s1, %s179
          %s182 = sshll.u32 %s173, 4
          %s183 = int_to_ptr.vmem [resolvable:$true] %s182
          %185 = dma.hbm_to_vmem [thread:$0]  %s180, 32, %s183, %s170
        $region24: #{tpu_custom_call.1} parent=15 // pred_fallthru
          _
      $region16: #{tpu_custom_call.1} parent=5 // pred_fallthru
        _
      %p186 = scmp.le.s32.totalorder 1, %s17
      %p187 = scmp.lt.s32.totalorder %s17, 3
      %p188 = pnand %p186, %p187
      %p189 = pneg %p188
      // Predicated region
      $region25: #{tpu_custom_call.1} parent=5 // pred_check
        _
      $region26: #{tpu_custom_call.1} parent=5 // pred_check_branch
        %191 = sbr.rel (%p188) target = $region28
      $region27: #{tpu_custom_call.1} parent=5 // pred_region
        %s192 = ssub.s32 %s17, 1
        %s193 = sand.u32 %s53, 1
        %s194 = scalar_lea.sflag [#allocation4], %s193
        %s195 = sand.u32 %s53, 1
        %s196 = smul.addr %s195, 8
        %s197 = scalar_lea.vmem [#allocation3], %s196
        // Predicated region
        $region29: #{tpu_custom_call.1} parent=27 // pred_check
          %p198 = pneg %p66
        $region30: #{tpu_custom_call.1} parent=27 // pred_check_branch
          %200 = sbr.rel (%p198) target = $region32
        $region31: #{tpu_custom_call.1} parent=27 // pred_region
          %201 = dma.done %s194, 128
        $region32: #{tpu_custom_call.1} parent=27 // pred_fallthru
          _
        %s202 = sand.u32 %s83, 1
        %s203 = scalar_lea.sflag [#allocation7], %s202
        %s204 = sand.u32 %s83, 1
        %s205 = smul.addr %s204, 2
        %s206 = scalar_lea.vmem [#allocation6], %s205
        // Predicated region
        $region33: #{tpu_custom_call.1} parent=27 // pred_check
          %p207 = pneg %p96
        $region34: #{tpu_custom_call.1} parent=27 // pred_check_branch
          %209 = sbr.rel (%p207) target = $region36
        $region35: #{tpu_custom_call.1} parent=27 // pred_region
          %210 = dma.done %s203, 32
        $region36: #{tpu_custom_call.1} parent=27 // pred_fallthru
          _
        %s211 = sand.u32 %s53, 1
        %s212 = scalar_lea.sflag [#allocation4], %s211
        %s213 = sand.u32 %s53, 1
        %s214 = smul.addr %s213, 8
        %s215 = scalar_lea.vmem [#allocation3], %s214
        %p216 = pneg %p66
        %p217 = pneg %p63
        %s218 = sand.u32 %s83, 1
        %s219 = scalar_lea.sflag [#allocation7], %s218
        %s220 = sand.u32 %s83, 1
        %s221 = smul.addr %s220, 2
        %s222 = scalar_lea.vmem [#allocation6], %s221
        %p223 = pneg %p96
        %p224 = pneg %p93
        %p225 = pneg %p124
        %p226 = pneg %p121
        %s227 = sand.u32 %s111, 1
        %s228 = scalar_lea.sflag [#allocation5], %s227
        %s229 = sand.u32 %s111, 1
        %s230 = smul.addr %s229, 8
        %s231 = scalar_lea.vmem [#allocation8], %s230
        %s232 = sadd.s32 %s28, %s29
        %s233 = sadd.s32 %s28, %s29
        %p234 = scmp.eq.s32.totalorder %s29, 0
        // Predicated region
        $region37: #{tpu_custom_call.1} parent=27 // pred_check
          %p235 = pneg %p234
        $region38: #{tpu_custom_call.1} parent=27 // pred_check_branch
          %237 = sbr.rel (%p235) target = $region40
        $region39: #{tpu_custom_call.1} parent=27 // pred_region
          %238 = vst [vmem:[#allocation2] sm:$0x3] 0.0
        $region40: #{tpu_custom_call.1} parent=27 // pred_fallthru
          _
        %v239 = vld [vmem:[%s206] sm:$0x3]
        %v240 = vld [vmem:[%s197] sm:$0x3]
        %s241 = scalar_lea.vmem %s197, 2 [#allocation3]
        %v242 = vld [vmem:[%s241] sm:$0x3]
        %v243 = vmax.f32 %v240, %v242
        %s244 = scalar_lea.vmem %s197, 4 [#allocation3]
        %v245 = vld [vmem:[%s244] sm:$0x3]
        %v246 = vmax.f32 %v243, %v245
        %s247 = scalar_lea.vmem %s197, 6 [#allocation3]
        %v248 = vld [vmem:[%s247] sm:$0x3]
        %v249 = vmax.f32 %v246, %v248
        %v250 = vsub.f32 %v240, %v249
        %v251 = vmul.f32 %v250, 1.442695
        %v252 = vpow.pop %v251
        %v253 = vadd.f32 %v252, 0.0
        %vm254 = vcmp.eq.s32.totalorder %v239, 0
        %v255 = vsel %vm254, %v240, 0.0
        %v256 = vadd.f32 %v255, 0.0
        %v257 = vsub.f32 %v242, %v249
        %v258 = vmul.f32 %v257, 1.442695
        %v259 = vpow.pop %v258
        %v260 = vadd.f32 %v253, %v259
        %vm261 = vcmp.eq.s32.totalorder %v239, 1
        %v262 = vsel %vm261, %v242, 0.0
        %v263 = vadd.f32 %v256, %v262
        %v264 = vsub.f32 %v245, %v249
        %v265 = vmul.f32 %v264, 1.442695
        %v266 = vpow.pop %v265
        %v267 = vadd.f32 %v260, %v266
        %vm268 = vcmp.eq.s32.totalorder %v239, 2
        %v269 = vsel %vm268, %v245, 0.0
        %v270 = vadd.f32 %v263, %v269
        %v271 = vsub.f32 %v248, %v249
        %v272 = vmul.f32 %v271, 1.442695
        %v273 = vpow.pop %v272
        %v274 = vadd.f32 %v267, %v273
        %vm275 = vcmp.eq.s32.totalorder %v239, 3
        %v276 = vsel %vm275, %v248, 0.0
        %v277 = vadd.f32 %v270, %v276
        %v278 = vlog2.pop %v274
        %v279 = vmul.f32 %v278, 0.6931472
        %v280 = vadd.f32 %v279, %v249
        %v281 = vsub.f32 %v280, %v277
        %vm282 = vcmp.ne.s32.totalorder %v239, 255
        %v283 = vsel %vm282, %v281, 0.0
        %v284 = vsub.f32 0.0, %v283
        %v285 = vmul.f32 %v284, 1.442695
        %v286 = vpow.pop %v285
        %v287 = vsub.f32 1.0, %v286
        %v288 = vmul.f32 %v287, %v287
        %v289 = vld [vmem:[#allocation2] sm:$0x3]
        %v290 = vmul.f32 %v288, %v283
        %v291 = vadd.f32 %v289, %v290
        %292 = vst [vmem:[#allocation2] sm:$0x3] %v291
        // Predicated region
        $region41: #{tpu_custom_call.1} parent=27 // pred_check
          %p293 = pneg %p234
        $region42: #{tpu_custom_call.1} parent=27 // pred_check_branch
          %295 = sbr.rel (%p293) target = $region44
        $region43: #{tpu_custom_call.1} parent=27 // pred_region
          %v296 = vld [vmem:[#allocation2] sm:$0x3]
          %vm297 = vcmask 1041408
          %v298 = vsel %vm297, %v296, 0.0
          %299 = vadd.xlane.f32.xlu0 %v298
          %v300 = vpop.xlane.xlu0 %299
          %v301 = vrot.slane %v300, 4
          %v302 = vadd.f32 %v300, %v301
          %v303 = vrot.slane %v302, 2
          %v304 = vadd.f32 %v302, %v303
          %v305 = vrot.slane %v304, 1
          %v306 = vadd.f32 %v304, %v305
          %s307 = vtos %v306
          %v308 = vstv %s307
          %309 = vst [vmem:[%s231] sm:$0xff] %v308
        $region44: #{tpu_custom_call.1} parent=27 // pred_fallthru
          _
        %s310 = sand.u32 %s111, 1
        %s311 = scalar_lea.sflag [#allocation5], %s310
        %s312 = sand.u32 %s111, 1
        %s313 = smul.addr %s312, 8
        %s314 = scalar_lea.vmem [#allocation8], %s313
        // Predicated region
        $region45: #{tpu_custom_call.1} parent=27 // pred_check
          %p315 = pneg %p121
        $region46: #{tpu_custom_call.1} parent=27 // pred_check_branch
          %317 = sbr.rel (%p315) target = $region48
        $region47: #{tpu_custom_call.1} parent=27 // pred_region
          %s319 = ssub.s32 128, 128
          %320 = vsyncadd %s311, %s319
          %s321 = sadd.s32 %s28, %s27
          %s322 = smul.addr %s321, 128
          %s323 = scalar_lea.hbm %s2, %s322
          %s325 = sshll.u32 %s314, 4
          %s326 = int_to_ptr.vmem [resolvable:$true] %s325
          %328 = dma.vmem_to_hbm [thread:$0]  %s326, 128, %s323, %s311
        $region48: #{tpu_custom_call.1} parent=27 // pred_fallthru
          _
      $region28: #{tpu_custom_call.1} parent=5 // pred_fallthru
        _
      %p329 = scmp.le.s32.totalorder 2, %s17
      // Predicated region
      $region49: #{tpu_custom_call.1} parent=5 // pred_check
        %p330 = pneg %p329
      $region50: #{tpu_custom_call.1} parent=5 // pred_check_branch
        %332 = sbr.rel (%p330) target = $region52
      $region51: #{tpu_custom_call.1} parent=5 // pred_region
        %s333 = ssub.s32 %s17, 2
        // Predicated region
        $region53: #{tpu_custom_call.1} parent=51 // pred_check
          %p334 = pneg %p127
        $region54: #{tpu_custom_call.1} parent=51 // pred_check_branch
          %336 = sbr.rel (%p334) target = $region56
        $region55: #{tpu_custom_call.1} parent=51 // pred_region
          %s337 = sand.u32 %s112, 1
          %s338 = scalar_lea.sflag [#allocation5], %s337
          %s339 = sand.u32 %s112, 1
          %s340 = smul.addr %s339, 8
          %s341 = scalar_lea.vmem [#allocation8], %s340
          %342 = dma.done %s338, 128
        $region56: #{tpu_custom_call.1} parent=51 // pred_fallthru
          _
      $region52: #{tpu_custom_call.1} parent=5 // pred_fallthru
        _
    $region6: #{tpu_custom_call.1} parent=1 // loop_footer
      %s21 = sadd.s32 1, %s17
    $region7: #{tpu_custom_call.1} parent=1 // loop_footer_branch
      %16 = sbr.rel target = $region3
    $region8: #{tpu_custom_call.1} parent=1 // loop_exit
      _
    %343 = vsyncpa [#allocation4], 1
    %s344 = scalar_lea.sflag [#allocation4], 1
    %345 = vsyncpa %s344, 1
    %346 = vsyncpa [#allocation7], 1
    %s347 = scalar_lea.sflag [#allocation7], 1
    %348 = vsyncpa %s347, 1
    %349 = vsyncpa [#allocation5], 1
    %s350 = scalar_lea.sflag [#allocation5], 1
    %351 = vsyncpa %s350, 1

</llo_original>
